<compile_context>
chip_gen: v6e
topology: v6e:2x2x1
jax: 0.10.0
libtpu: 0.0.40
codegen_flags: <defaults>
</compile_context>

<pallas_src>
import functools

import jax
import jax.numpy as jnp
from jax import lax
from jax.experimental import pallas as pl
from jax.experimental.pallas import tpu as pltpu

NUM_JOINTS = 14
LANES = 896                          # lcm(14, 128): lane-dense row width
PERIODS = LANES // NUM_JOINTS        # 64 copies of the 14-weight pattern per row
NCORES = 2                           # v7x TensorCores; harmless (2 grid steps) on 1-TC chips
SMALL_FASTPATH_ELEMS = 64 * 1024     # below this, plain XLA beats pallas_call fixed cost


def _cdiv(a, b):
    return -(-a // b)


def _round_up(x, m):
    return ((x + m - 1) // m) * m


def _make_joint_weights():
    # Matches the module's __init__: ones(14), wrist indices [4, 11] = 2.0.
    w = jnp.ones((NUM_JOINTS,), dtype=jnp.float32)
    w = w.at[jnp.array([4, 11])].set(2.0)
    return w


def _tile_rows_cap():
    """512 rows (1.75 MiB/input tile) for v5e/v6e; 2048 for v7x."""
    cap = 512
    try:
        info = pltpu.get_tpu_info()
        vmem = int(getattr(info, "vmem_capacity_bytes", 0) or 0)
        # v7x exposes ~64 MiB VMEM per TensorCore (v5e/v6e: 128 MiB) and has
        # ~3.2 TB/s HBM: bigger tiles amortize the ~0.35us/step overhead there.
        if 0 < vmem <= 80 * (1 << 20):
            cap = 2048
    except Exception:
        cap = 512
    return cap


def _weighted_l2_kernel(pred_ref, target_ref, w_ref, out_ref, *,
                        tile_rows, steps_per_core, total_rows, chunk,
                        needs_mask, unroll):
    core = pl.program_id(0)
    step = pl.program_id(1)

    @pl.when(step == 0)
    def _init():
        out_ref[...] = jnp.zeros_like(out_ref)

    # First global row covered by this (core, step) tile.
    row0 = (core * steps_per_core + step) * tile_rows

    if needs_mask:
        # Row index of each element within a chunk (hoisted out of the loop).
        local_rows = lax.broadcasted_iota(jnp.int32, (chunk, LANES), 0)

    n_chunks = tile_rows // chunk

    def body(c, acc):
        off = pl.multiple_of(c * chunk, chunk)
        # Upcast after load: bf16 inputs stream at native width; no-op for f32.
        p = pred_ref[pl.ds(off, chunk), :].astype(jnp.float32)
        t = target_ref[pl.ds(off, chunk), :].astype(jnp.float32)
        d = p - t
        sq = d * d
        if needs_mask:
            # Zero the (undefined) rows of the partial last block.
            sq = jnp.where(row0 + off + local_rows < total_rows, sq, 0.0)
        if chunk != 8:
            sq = sq.reshape(chunk // 8, 8, LANES).sum(axis=0)
        return acc + sq

    acc = lax.fori_loop(0, n_chunks, body,
                        jnp.zeros((8, LANES), jnp.float32), unroll=unroll)

    # 896 % 14 == 0, so every row has the identical per-column weight pattern;
    # apply the weight once to the row-folded sum (fewer VPU muls).
    out_ref[...] += acc * w_ref[...]


def weighted_l2_loss(pred, target, joint_weights):
    assert pred.shape == target.shape and pred.dtype == target.dtype
    B, J = pred.shape
    assert J == NUM_JOINTS

    n_true = B * J
    inv_n = 1.0 / float(n_true)
    w32 = joint_weights.astype(jnp.float32).reshape(-1)

    # --- tiny-input fast path -------------------------------------------------
    if n_true < SMALL_FASTPATH_ELEMS:
        d = pred.astype(jnp.float32) - target.astype(jnp.float32)
        return jnp.mean(d * d * w32.reshape(1, -1))

    # --- lane-dense repacking (views; copy only in the ragged-element case) ---
    itemsize = jnp.dtype(pred.dtype).itemsize
    chunk = {4: 8, 2: 16, 1: 32}.get(itemsize, 8)   # sublane granularity

    pred_flat = pred.reshape(-1)       # contiguous row-major: free view
    target_flat = target.reshape(-1)

    rows = _cdiv(n_true, LANES)
    if n_true % LANES:
        # Pad elements are zero (pred == target == 0) -> contribute exactly 0.
        pad = rows * LANES - n_true
        pred_flat = jnp.pad(pred_flat, (0, pad))
        target_flat = jnp.pad(target_flat, (0, pad))
    pred2d = pred_flat.reshape(rows, LANES)
    target2d = target_flat.reshape(rows, LANES)

    # --- tiling: minimal over-coverage, partial last block masked in-kernel ---
    cap = _tile_rows_cap()
    nsteps = _round_up(max(1, _cdiv(rows, cap)), NCORES)
    tile_rows = _round_up(_cdiv(rows, nsteps), chunk)
    steps_per_core = nsteps // NCORES
    needs_mask = (nsteps * tile_rows != rows)

    # One lane-dense (8, 896) weight block; fetched once per core (constant
    # block index), ~28 KB of HBM traffic.
    w_block = jnp.tile(w32, PERIODS * 8).reshape(8, LANES)

    kernel = functools.partial(
        _weighted_l2_kernel,
        tile_rows=tile_rows, steps_per_core=steps_per_core, total_rows=rows,
        chunk=chunk, needs_mask=needs_mask,
        unroll=min(8, max(1, tile_rows // chunk)))

    tile_bytes = tile_rows * LANES * itemsize
    vmem_limit = int(min(56 << 20, max(32 << 20, 4 * tile_bytes + (4 << 20))))

    partials = pl.pallas_call(
        kernel,
        out_shape=jax.ShapeDtypeStruct((NCORES * 8, LANES), jnp.float32),
        grid_spec=pltpu.PrefetchScalarGridSpec(
            num_scalar_prefetch=0,
            grid=(NCORES, steps_per_core),
            in_specs=[
                pl.BlockSpec((tile_rows, LANES),
                             lambda c, i: (c * steps_per_core + i, 0)),
                pl.BlockSpec((tile_rows, LANES),
                             lambda c, i: (c * steps_per_core + i, 0)),
                pl.BlockSpec((8, LANES), lambda c, i: (0, 0)),
            ],
            out_specs=pl.BlockSpec((8, LANES), lambda c, i: (c, 0)),
        ),
        compiler_params=pltpu.CompilerParams(
            dimension_semantics=("parallel", "arbitrary"),
            vmem_limit_bytes=vmem_limit,
        ),
    )(pred2d, target2d, w_block)

    # Tiny XLA epilogue: cross-core + cross-lane reduction and the mean scale.
    return jnp.sum(partials) * inv_n


if __name__ == "__main__":
    key = jax.random.PRNGKey(0)
    weights = _make_joint_weights()

    cases = [
        8,       # XLA fast path (tiny)
        8192,    # kernel: rows aligned, no masking, no element pad
        6000,    # kernel: ragged tail -> element pad + in-kernel row masking
        40000,   # kernel: no element pad, partial last block masked, big tiles
    ]
    keys = jax.random.split(key, 2 * len(cases))
    for idx, B in enumerate(cases):
        kp, kt = keys[2 * idx], keys[2 * idx + 1]
        pred = jax.random.normal(kp, (B, NUM_JOINTS), dtype=jnp.float32)
        target = jax.random.normal(kt, (B, NUM_JOINTS), dtype=jnp.float32)

        loss = jax.block_until_ready(weighted_l2_loss(pred, target, weights))
        ref = jnp.mean(((pred - target) ** 2) * weights.reshape(1, -1))
        assert jnp.allclose(loss, ref, rtol=1e-4, atol=1e-6), (B, loss, ref)

    print("KERNEL_OK")
</pallas_src>

<mosaic_0001>
module attributes {stable_mosaic.version = 11 : i64} {
  func.func @_weighted_l2_kernel(%arg0: i32, %arg1: i32, %arg2: memref<64x896xf32, #tpu.memory_space<vmem>>, %arg3: memref<64x896xf32, #tpu.memory_space<vmem>>, %arg4: memref<8x896xf32, #tpu.memory_space<vmem>>, %arg5: memref<8x896xf32, #tpu.memory_space<vmem>>) attributes {dimension_semantics = [#tpu.dimension_semantics<parallel>, #tpu.dimension_semantics<arbitrary>], iteration_bounds = array<i64: 2, 1>, scalar_prefetch = 0 : i64, scratch_operands = 0 : i64, tpu.core_type = #tpu.core_type<tc>, window_params = [{transform_indices = @transform_0, window_bounds = array<i64: 64, 896>}, {transform_indices = @transform_1, window_bounds = array<i64: 64, 896>}, {pipeline_mode = #tpu.pipeline_mode<synchronous>, transform_indices = @transform_2, window_bounds = array<i64: 8, 896>}, {transform_indices = @transform_3, window_bounds = array<i64: 8, 896>}]} {
    %c0_i32 = arith.constant 0 : i32
    %0 = arith.cmpi eq, %arg1, %c0_i32 : i32
    %1 = arith.extui %0 : i1 to i32
    %c0_i32_0 = arith.constant 0 : i32
    %2 = arith.cmpi ne, %1, %c0_i32_0 : i32
    scf.if %2 {
      %cst_31 = arith.constant 0.000000e+00 : f32
      %81 = vector.broadcast %cst_31 : f32 to vector<8x896xf32>
      %c0_32 = arith.constant 0 : index
      %c0_33 = arith.constant 0 : index
      %82 = vector.load %arg5[%c0_32, %c0_33] : memref<8x896xf32, #tpu.memory_space<vmem>>, vector<8x896xf32>
      tpu.vector_store %arg5[%c0_32, %c0_33], %81 {strides = array<i32>} : memref<8x896xf32, #tpu.memory_space<vmem>>, vector<8x896xf32>,
    } else {
    }
    %cst = arith.constant 0.000000e+00 : f32
    %3 = vector.broadcast %cst : f32 to vector<8x896xf32>
    %c0_i32_1 = arith.constant 0 : i32
    %c8_i32 = arith.constant 8 : i32
    %4 = arith.muli %c0_i32_1, %c8_i32 : i32
    %5 = tpu.assume_multiple %4, 8 : i32
    %6 = arith.index_cast %5 : i32 to index
    %c0 = arith.constant 0 : index
    %7 = vector.load %arg2[%6, %c0] : memref<64x896xf32, #tpu.memory_space<vmem>>, vector<8x896xf32>
    %8 = arith.index_cast %5 : i32 to index
    %c0_2 = arith.constant 0 : index
    %9 = vector.load %arg3[%8, %c0_2] : memref<64x896xf32, #tpu.memory_space<vmem>>, vector<8x896xf32>
    %10 = arith.subf %7, %9 : vector<8x896xf32>
    %11 = arith.mulf %10, %10 : vector<8x896xf32>
    %12 = arith.addf %3, %11 : vector<8x896xf32>
    %c1_i32 = arith.constant 1 : i32
    %c8_i32_3 = arith.constant 8 : i32
    %13 = arith.muli %c1_i32, %c8_i32_3 : i32
    %14 = tpu.assume_multiple %13, 8 : i32
    %15 = arith.index_cast %14 : i32 to index
    %c0_4 = arith.constant 0 : index
    %16 = vector.load %arg2[%15, %c0_4] : memref<64x896xf32, #tpu.memory_space<vmem>>, vector<8x896xf32>
    %17 = arith.index_cast %14 : i32 to index
    %c0_5 = arith.constant 0 : index
    %18 = vector.load %arg3[%17, %c0_5] : memref<64x896xf32, #tpu.memory_space<vmem>>, vector<8x896xf32>
    %19 = arith.subf %16, %18 : vector<8x896xf32>
    %20 = arith.mulf %19, %19 : vector<8x896xf32>
    %21 = arith.addf %12, %20 : vector<8x896xf32>
    %c2_i32 = arith.constant 2 : i32
    %c8_i32_6 = arith.constant 8 : i32
    %22 = arith.muli %c2_i32, %c8_i32_6 : i32
    %23 = tpu.assume_multiple %22, 8 : i32
    %24 = arith.index_cast %23 : i32 to index
    %c0_7 = arith.constant 0 : index
    %25 = vector.load %arg2[%24, %c0_7] : memref<64x896xf32, #tpu.memory_space<vmem>>, vector<8x896xf32>
    %26 = arith.index_cast %23 : i32 to index
    %c0_8 = arith.constant 0 : index
    %27 = vector.load %arg3[%26, %c0_8] : memref<64x896xf32, #tpu.memory_space<vmem>>, vector<8x896xf32>
    %28 = arith.subf %25, %27 : vector<8x896xf32>
    %29 = arith.mulf %28, %28 : vector<8x896xf32>
    %30 = arith.addf %21, %29 : vector<8x896xf32>
    %c3_i32 = arith.constant 3 : i32
    %c8_i32_9 = arith.constant 8 : i32
    %31 = arith.muli %c3_i32, %c8_i32_9 : i32
    %32 = tpu.assume_multiple %31, 8 : i32
    %33 = arith.index_cast %32 : i32 to index
    %c0_10 = arith.constant 0 : index
    %34 = vector.load %arg2[%33, %c0_10] : memref<64x896xf32, #tpu.memory_space<vmem>>, vector<8x896xf32>
    %35 = arith.index_cast %32 : i32 to index
    %c0_11 = arith.constant 0 : index
    %36 = vector.load %arg3[%35, %c0_11] : memref<64x896xf32, #tpu.memory_space<vmem>>, vector<8x896xf32>
    %37 = arith.subf %34, %36 : vector<8x896xf32>
    %38 = arith.mulf %37, %37 : vector<8x896xf32>
    %39 = arith.addf %30, %38 : vector<8x896xf32>
    %c4_i32 = arith.constant 4 : i32
    %c8_i32_12 = arith.constant 8 : i32
    %40 = arith.muli %c4_i32, %c8_i32_12 : i32
    %41 = tpu.assume_multiple %40, 8 : i32
    %42 = arith.index_cast %41 : i32 to index
    %c0_13 = arith.constant 0 : index
    %43 = vector.load %arg2[%42, %c0_13] : memref<64x896xf32, #tpu.memory_space<vmem>>, vector<8x896xf32>
    %44 = arith.index_cast %41 : i32 to index
    %c0_14 = arith.constant 0 : index
    %45 = vector.load %arg3[%44, %c0_14] : memref<64x896xf32, #tpu.memory_space<vmem>>, vector<8x896xf32>
    %46 = arith.subf %43, %45 : vector<8x896xf32>
    %47 = arith.mulf %46, %46 : vector<8x896xf32>
    %48 = arith.addf %39, %47 : vector<8x896xf32>
    %c5_i32 = arith.constant 5 : i32
    %c8_i32_15 = arith.constant 8 : i32
    %49 = arith.muli %c5_i32, %c8_i32_15 : i32
    %50 = tpu.assume_multiple %49, 8 : i32
    %51 = arith.index_cast %50 : i32 to index
    %c0_16 = arith.constant 0 : index
    %52 = vector.load %arg2[%51, %c0_16] : memref<64x896xf32, #tpu.memory_space<vmem>>, vector<8x896xf32>
    %53 = arith.index_cast %50 : i32 to index
    %c0_17 = arith.constant 0 : index
    %54 = vector.load %arg3[%53, %c0_17] : memref<64x896xf32, #tpu.memory_space<vmem>>, vector<8x896xf32>
    %55 = arith.subf %52, %54 : vector<8x896xf32>
    %56 = arith.mulf %55, %55 : vector<8x896xf32>
    %57 = arith.addf %48, %56 : vector<8x896xf32>
    %c6_i32 = arith.constant 6 : i32
    %c8_i32_18 = arith.constant 8 : i32
    %58 = arith.muli %c6_i32, %c8_i32_18 : i32
    %59 = tpu.assume_multiple %58, 8 : i32
    %60 = arith.index_cast %59 : i32 to index
    %c0_19 = arith.constant 0 : index
    %61 = vector.load %arg2[%60, %c0_19] : memref<64x896xf32, #tpu.memory_space<vmem>>, vector<8x896xf32>
    %62 = arith.index_cast %59 : i32 to index
    %c0_20 = arith.constant 0 : index
    %63 = vector.load %arg3[%62, %c0_20] : memref<64x896xf32, #tpu.memory_space<vmem>>, vector<8x896xf32>
    %64 = arith.subf %61, %63 : vector<8x896xf32>
    %65 = arith.mulf %64, %64 : vector<8x896xf32>
    %66 = arith.addf %57, %65 : vector<8x896xf32>
    %c7_i32 = arith.constant 7 : i32
    %c8_i32_21 = arith.constant 8 : i32
    %67 = arith.muli %c7_i32, %c8_i32_21 : i32
    %68 = tpu.assume_multiple %67, 8 : i32
    %69 = arith.index_cast %68 : i32 to index
    %c0_22 = arith.constant 0 : index
    %70 = vector.load %arg2[%69, %c0_22] : memref<64x896xf32, #tpu.memory_space<vmem>>, vector<8x896xf32>
    %71 = arith.index_cast %68 : i32 to index
    %c0_23 = arith.constant 0 : index
    %72 = vector.load %arg3[%71, %c0_23] : memref<64x896xf32, #tpu.memory_space<vmem>>, vector<8x896xf32>
    %73 = arith.subf %70, %72 : vector<8x896xf32>
    %74 = arith.mulf %73, %73 : vector<8x896xf32>
    %75 = arith.addf %66, %74 : vector<8x896xf32>
    %c8_i32_24 = arith.constant 8 : i32
    %c0_25 = arith.constant 0 : index
    %c0_26 = arith.constant 0 : index
    %76 = vector.load %arg5[%c0_25, %c0_26] : memref<8x896xf32, #tpu.memory_space<vmem>>, vector<8x896xf32>
    %c0_27 = arith.constant 0 : index
    %c0_28 = arith.constant 0 : index
    %77 = vector.load %arg4[%c0_27, %c0_28] : memref<8x896xf32, #tpu.memory_space<vmem>>, vector<8x896xf32>
    %78 = arith.mulf %75, %77 : vector<8x896xf32>
    %79 = arith.addf %76, %78 : vector<8x896xf32>
    %c0_29 = arith.constant 0 : index
    %c0_30 = arith.constant 0 : index
    %80 = vector.load %arg5[%c0_29, %c0_30] : memref<8x896xf32, #tpu.memory_space<vmem>>, vector<8x896xf32>
    tpu.vector_store %arg5[%c0_29, %c0_30], %79 {strides = array<i32>} : memref<8x896xf32, #tpu.memory_space<vmem>>, vector<8x896xf32>,
    return
  }
  func.func @transform_0(%arg0: i32, %arg1: i32) -> (i32, i32) {
    %c1_i32 = arith.constant 1 : i32
    %0 = arith.muli %arg0, %c1_i32 : i32
    %1 = arith.addi %0, %arg1 : i32
    %c0_i32 = arith.constant 0 : i32
    %c0_i32_0 = arith.constant 0 : i32
    return %1, %c0_i32 : i32, i32
  }
  func.func @transform_1(%arg0: i32, %arg1: i32) -> (i32, i32) {
    %c1_i32 = arith.constant 1 : i32
    %0 = arith.muli %arg0, %c1_i32 : i32
    %1 = arith.addi %0, %arg1 : i32
    %c0_i32 = arith.constant 0 : i32
    %c0_i32_0 = arith.constant 0 : i32
    return %1, %c0_i32 : i32, i32
  }
  func.func @transform_2(%arg0: i32, %arg1: i32) -> (i32, i32) {
    %c0_i32 = arith.constant 0 : i32
    %c0_i32_0 = arith.constant 0 : i32
    %c0_i32_1 = arith.constant 0 : i32
    return %c0_i32, %c0_i32_0 : i32, i32
  }
  func.func @transform_3(%arg0: i32, %arg1: i32) -> (i32, i32) {
    %c0_i32 = arith.constant 0 : i32
    %c0_i32_0 = arith.constant 0 : i32
    return %arg0, %c0_i32 : i32, i32
  }
}

</mosaic_0001>

<llo_original>
// kernel: tpu_custom_call.1
$region0: #{tpu_custom_call.1}
  #allocation0 [shape = 'u32[]', space=smem, size = 0x4, offset = 0x4, fixed_abs, tag = 'smem constant byte address 0x4 - core index']
  #allocation1 [shape = 'u32[144,128]{1,0:T(1,128)}', space=vmem, size = 0x12000, scoped, tag = 'internal scratch']
  %s0 = inlined_call_operand.hbm [shape: f32[128,896], index: 0, kind: input, shape index: {}]
  %s1 = inlined_call_operand.hbm [shape: f32[128,896], index: 1, kind: input, shape index: {}]
  %s2 = inlined_call_operand.hbm [shape: f32[8,896], index: 2, kind: input, shape index: {}]
  %s3 = inlined_call_operand.hbm [shape: f32[16,896], index: 3, kind: output, shape index: {}]
  %s4 = sld [smem:[#allocation0]]
  $region61: #{tpu_custom_call.1} parent=0
    _
  %s6 = ssub.s32 1, %s4
  %s7 = scalar_select 0, %s6, %s4
  $region1: #{tpu_custom_call.1} parent=0
    #allocation2 [shape = 'u8[458752]{0}', space=vmem, size = 0x70000, scoped, tag = 'input window, operand 0']
    #allocation3 [shape = 's32[2]{0}', space=sflag, size = 0x8, scoped, tag = 'scoped memory for tpu_custom_call.1']
    #allocation4 [shape = 's32[2]{0}', space=sflag, size = 0x8, scoped, tag = 'scoped memory for tpu_custom_call.1']
    #allocation5 [shape = 'u8[458752]{0}', space=vmem, size = 0x70000, scoped, tag = 'input window, operand 1']
    #allocation6 [shape = 's32[2]{0}', space=sflag, size = 0x8, scoped, tag = 'scoped memory for tpu_custom_call.1']
    #allocation7 [shape = 'u8[28672]{0}', space=vmem, size = 0x7000, scoped, tag = 'input window, operand 2, single buffered']
    #allocation8 [shape = 'u8[57344]{0}', space=vmem, size = 0xe000, scoped, tag = 'output window, operand 0']
    %8 = vsyncpa [#allocation3], 0
    %s9 = scalar_lea.sflag [#allocation3], 1
    %10 = vsyncpa %s9, 0
    %11 = vsyncpa [#allocation6], 0
    %s12 = scalar_lea.sflag [#allocation6], 1
    %13 = vsyncpa %s12, 0
    %14 = vsyncpa [#allocation4], 0
    %s15 = scalar_lea.sflag [#allocation4], 1
    %16 = vsyncpa %s15, 0
    loop: start=0, step=1, limit=4
    $region2: #{tpu_custom_call.1} parent=1 // loop_pre_header
      _
    $region3: #{tpu_custom_call.1} parent=1 // loop_header
      %s18 = sphi 0, %s22
      %p19 = scmp.ge.s32.totalorder %s18, 4
      %s25 = sphi 0, %s37
      %s26 = sphi 0, %s33
      %s27 = sphi 0, %s25
      %s28 = sphi 0, %s26
      %s29 = sphi 0, %s27
      %s30 = sphi 0, %s28
      %s42 = sphi 0, %s44
      %s45 = sphi 0, %s42
      %s46 = sphi 0, %s45
      %s62 = sphi 0, %s46
      %s70 = sphi 0, %s72
      %s73 = sphi 0, %s70
      %s74 = sphi 0, %s73
      %s90 = sphi 0, %s74
      %s94 = sphi 0, %s94
      %s96 = sphi 0, %s94
      %s97 = sphi 0, %s96
      %s111 = sphi 0, %s97
      %s117 = sphi 0, %s119
      %s120 = sphi 0, %s117
      %s121 = sphi 0, %s120
      %s137 = sphi 0, %s121
    $region4: #{tpu_custom_call.1} parent=1 // loop_header_branch
      %21 = sbr.rel (%p19) target = $region8
    $region5: #{tpu_custom_call.1} parent=1 // loop_body
      %s23 = ssub.s32 %s18, 1
      %s24 = ssub.s32 %s18, 2
      %s31 = sadd.s32 1, %s26
      %p32 = scmp.ge.s32.totalorder %s31, 1
      %s33 = scalar_select %p32, 0, %s31
      %s34 = sadd.s32 1, %s25
      %s35 = scalar_select %p32, %s34, %s25
      %p36 = scmp.ge.s32.totalorder %s35, 2
      %s37 = scalar_select %p36, 0, %s35
      %s38 = sadd.s32 %s25, %s26
      %s39 = sadd.s32 %s37, %s33
      %s40 = ssub.s32 %s38, %s39
      %p41 = scmp.eq.s32.totalorder %s40, 0
      %s43 = sadd.s32 %s42, 1
      %s44 = scalar_select %p41, %s42, %s43
      %p47 = pneg %p41
      %p48 = scmp.eq.s32.totalorder %s18, 1
      %p49 = por %p47, %p48
      %p50 = scmp.ne.s32.totalorder %s42, %s45
      %p51 = scmp.eq.s32.totalorder %s18, 0
      %p52 = por %p50, %p51
      %p53 = scmp.ne.s32.totalorder %s42, %s45
      %p54 = scmp.eq.s32.totalorder %s23, 1
      %p55 = por %p53, %p54
      %p56 = scmp.ne.s32.totalorder %s45, %s46
      %p57 = scmp.eq.s32.totalorder %s23, 0
      %p58 = por %p56, %p57
      %p59 = scmp.ne.s32.totalorder %s45, %s46
      %p60 = scmp.eq.s32.totalorder %s24, 1
      %p61 = por %p59, %p60
      %p63 = scmp.ne.s32.totalorder %s46, %s62
      %p64 = scmp.eq.s32.totalorder %s24, 0
      %p65 = por %p63, %p64
      %s66 = sadd.s32 %s25, %s26
      %s67 = sadd.s32 %s37, %s33
      %s68 = ssub.s32 %s66, %s67
      %p69 = scmp.eq.s32.totalorder %s68, 0
      %s71 = sadd.s32 %s70, 1
      %s72 = scalar_select %p69, %s70, %s71
      %p75 = pneg %p69
      %p76 = scmp.eq.s32.totalorder %s18, 1
      %p77 = por %p75, %p76
      %p78 = scmp.ne.s32.totalorder %s70, %s73
      %p79 = scmp.eq.s32.totalorder %s18, 0
      %p80 = por %p78, %p79
      %p81 = scmp.ne.s32.totalorder %s70, %s73
      %p82 = scmp.eq.s32.totalorder %s23, 1
      %p83 = por %p81, %p82
      %p84 = scmp.ne.s32.totalorder %s73, %s74
      %p85 = scmp.eq.s32.totalorder %s23, 0
      %p86 = por %p84, %p85
      %p87 = scmp.ne.s32.totalorder %s73, %s74
      %p88 = scmp.eq.s32.totalorder %s24, 1
      %p89 = por %p87, %p88
      %p91 = scmp.ne.s32.totalorder %s74, %s90
      %p92 = scmp.eq.s32.totalorder %s24, 0
      %p93 = por %p91, %p92
      %s95 = sadd.s32 %s94, 1
      %p98 = scmp.eq.s32.totalorder %s18, 1
      %p99 = scmp.ne.s32.totalorder %s94, %s96
      %p100 = scmp.eq.s32.totalorder %s18, 0
      %p101 = por %p99, %p100
      %p102 = scmp.ne.s32.totalorder %s94, %s96
      %p103 = scmp.eq.s32.totalorder %s23, 1
      %p104 = por %p102, %p103
      %p105 = scmp.ne.s32.totalorder %s96, %s97
      %p106 = scmp.eq.s32.totalorder %s23, 0
      %p107 = por %p105, %p106
      %p108 = scmp.ne.s32.totalorder %s96, %s97
      %p109 = scmp.eq.s32.totalorder %s24, 1
      %p110 = por %p108, %p109
      %p112 = scmp.ne.s32.totalorder %s97, %s111
      %p113 = scmp.eq.s32.totalorder %s24, 0
      %p114 = por %p112, %p113
      %s115 = ssub.s32 %s25, %s37
      %p116 = scmp.eq.s32.totalorder %s115, 0
      %s118 = sadd.s32 %s117, 1
      %s119 = scalar_select %p116, %s117, %s118
      %p122 = pneg %p116
      %p123 = scmp.eq.s32.totalorder %s18, 1
      %p124 = por %p122, %p123
      %p125 = scmp.ne.s32.totalorder %s117, %s120
      %p126 = scmp.eq.s32.totalorder %s18, 0
      %p127 = por %p125, %p126
      %p128 = scmp.ne.s32.totalorder %s117, %s120
      %p129 = scmp.eq.s32.totalorder %s23, 1
      %p130 = por %p128, %p129
      %p131 = scmp.ne.s32.totalorder %s120, %s121
      %p132 = scmp.eq.s32.totalorder %s23, 0
      %p133 = por %p131, %p132
      %p134 = scmp.ne.s32.totalorder %s120, %s121
      %p135 = scmp.eq.s32.totalorder %s24, 1
      %p136 = por %p134, %p135
      %p138 = scmp.ne.s32.totalorder %s121, %s137
      %p139 = scmp.eq.s32.totalorder %s24, 0
      %p140 = por %p138, %p139
      %p141 = scmp.le.s32.totalorder 1, %s18
      %p142 = scmp.lt.s32.totalorder %s18, 3
      %p143 = pnand %p141, %p142
      %p144 = pneg %p143
      // Predicated region
      $region9: #{tpu_custom_call.1} parent=5 // pred_check
        _
      $region10: #{tpu_custom_call.1} parent=5 // pred_check_branch
        %146 = sbr.rel (%p143) target = $region12
      $region11: #{tpu_custom_call.1} parent=5 // pred_region
        %s147 = ssub.s32 %s18, 1
        // Predicated region
        $region13: #{tpu_custom_call.1} parent=11 // pred_check
          %p148 = pneg %p107
        $region14: #{tpu_custom_call.1} parent=11 // pred_check_branch
          %150 = sbr.rel (%p148) target = $region16
        $region15: #{tpu_custom_call.1} parent=11 // pred_region
          %s152 = ssub.s32 896, 896
          %153 = vsyncadd [#allocation6], %s152
          %s155 = sshll.u32 [#allocation7], 4
          %s156 = int_to_ptr.vmem [resolvable:$true] %s155
          %158 = dma.hbm_to_vmem [thread:$0]  %s2, 896, %s156, [#allocation6]
        $region16: #{tpu_custom_call.1} parent=11 // pred_fallthru
          _
      $region12: #{tpu_custom_call.1} parent=5 // pred_fallthru
        _
      %p159 = scmp.lt.s32.totalorder %s18, 2
      // Predicated region
      $region17: #{tpu_custom_call.1} parent=5 // pred_check
        %p160 = pneg %p159
      $region18: #{tpu_custom_call.1} parent=5 // pred_check_branch
        %162 = sbr.rel (%p160) target = $region20
      $region19: #{tpu_custom_call.1} parent=5 // pred_region
        // Predicated region
        $region21: #{tpu_custom_call.1} parent=19 // pred_check
          %p163 = pneg %p52
        $region22: #{tpu_custom_call.1} parent=19 // pred_check_branch
          %165 = sbr.rel (%p163) target = $region24
        $region23: #{tpu_custom_call.1} parent=19 // pred_region
          %s166 = sand.u32 %s42, 1
          %s167 = scalar_lea.sflag [#allocation3], %s166
          %s168 = sand.u32 %s42, 1
          %s169 = smul.addr %s168, 448
          %s170 = scalar_lea.vmem [#allocation2], %s169
          %s171 = sadd.s32 %s25, %s26
          %s172 = smul.u32 8, %s171
          %s174 = ssub.s32 7168, 7168
          %175 = vsyncadd %s167, %s174
          %s176 = smul.addr %s172, 7
          %s177 = smul.addr %s176, 128
          %s178 = scalar_lea.hbm %s0, %s177
          %s179 = sshll.u32 %s170, 4
          %s180 = int_to_ptr.vmem [resolvable:$true] %s179
          %185 = dma.hbm_to_vmem [thread:$0]  %s178, 7168, %s180, %s167, 896, 896, 56
        $region24: #{tpu_custom_call.1} parent=19 // pred_fallthru
          _
        // Predicated region
        $region25: #{tpu_custom_call.1} parent=19 // pred_check
          %p186 = pneg %p80
        $region26: #{tpu_custom_call.1} parent=19 // pred_check_branch
          %188 = sbr.rel (%p186) target = $region28
        $region27: #{tpu_custom_call.1} parent=19 // pred_region
          %s189 = sand.u32 %s18, 1
          %s190 = scalar_lea.sflag [#allocation6], %s189
          %s191 = sand.u32 %s70, 1
          %s192 = smul.addr %s191, 448
          %s193 = scalar_lea.vmem [#allocation5], %s192
          %s194 = sadd.s32 %s25, %s26
          %s195 = smul.u32 8, %s194
          %s197 = ssub.s32 7168, 7168
          %198 = vsyncadd %s190, %s197
          %s199 = smul.addr %s195, 7
          %s200 = smul.addr %s199, 128
          %s201 = scalar_lea.hbm %s1, %s200
          %s202 = sshll.u32 %s193, 4
          %s203 = int_to_ptr.vmem [resolvable:$true] %s202
          %208 = dma.hbm_to_vmem [thread:$0]  %s201, 7168, %s203, %s190, 896, 896, 56
        $region28: #{tpu_custom_call.1} parent=19 // pred_fallthru
          _
      $region20: #{tpu_custom_call.1} parent=5 // pred_fallthru
        _
      %p209 = scmp.le.s32.totalorder 1, %s18
      %p210 = scmp.lt.s32.totalorder %s18, 3
      %p211 = pnand %p209, %p210
      %p212 = pneg %p211
      // Predicated region
      $region29: #{tpu_custom_call.1} parent=5 // pred_check
        _
      $region30: #{tpu_custom_call.1} parent=5 // pred_check_branch
        %214 = sbr.rel (%p211) target = $region32
      $region31: #{tpu_custom_call.1} parent=5 // pred_region
        %s215 = ssub.s32 %s18, 1
        %s216 = sand.u32 %s45, 1
        %s217 = scalar_lea.sflag [#allocation3], %s216
        %s218 = sand.u32 %s45, 1
        %s219 = smul.addr %s218, 448
        %s220 = scalar_lea.vmem [#allocation2], %s219
        // Predicated region
        $region33: #{tpu_custom_call.1} parent=31 // pred_check
          %p221 = pneg %p58
        $region34: #{tpu_custom_call.1} parent=31 // pred_check_branch
          %223 = sbr.rel (%p221) target = $region36
        $region35: #{tpu_custom_call.1} parent=31 // pred_region
          %224 = dma.done %s217, 7168
        $region36: #{tpu_custom_call.1} parent=31 // pred_fallthru
          _
        %s225 = sand.u32 %s23, 1
        %s226 = scalar_lea.sflag [#allocation6], %s225
        %s227 = sand.u32 %s73, 1
        %s228 = smul.addr %s227, 448
        %s229 = scalar_lea.vmem [#allocation5], %s228
        // Predicated region
        $region37: #{tpu_custom_call.1} parent=31 // pred_check
          %p230 = pneg %p86
        $region38: #{tpu_custom_call.1} parent=31 // pred_check_branch
          %232 = sbr.rel (%p230) target = $region40
        $region39: #{tpu_custom_call.1} parent=31 // pred_region
          %233 = dma.done %s226, 7168
        $region40: #{tpu_custom_call.1} parent=31 // pred_fallthru
          _
        // Predicated region
        $region41: #{tpu_custom_call.1} parent=31 // pred_check
          %p234 = pneg %p107
        $region42: #{tpu_custom_call.1} parent=31 // pred_check_branch
          %236 = sbr.rel (%p234) target = $region44
        $region43: #{tpu_custom_call.1} parent=31 // pred_region
          %237 = dma.done [#allocation6], 896
        $region44: #{tpu_custom_call.1} parent=31 // pred_fallthru
          _
        %s238 = sand.u32 %s45, 1
        %s239 = scalar_lea.sflag [#allocation3], %s238
        %s240 = sand.u32 %s45, 1
        %s241 = smul.addr %s240, 448
        %s242 = scalar_lea.vmem [#allocation2], %s241
        %p243 = pneg %p58
        %p244 = pneg %p55
        %s245 = sand.u32 %s23, 1
        %s246 = scalar_lea.sflag [#allocation6], %s245
        %s247 = sand.u32 %s73, 1
        %s248 = smul.addr %s247, 448
        %s249 = scalar_lea.vmem [#allocation5], %s248
        %p250 = pneg %p86
        %p251 = pneg %p83
        %p252 = pneg %p107
        %p253 = pneg %p104
        %p254 = pneg %p133
        %p255 = pneg %p130
        %s256 = sand.u32 %s120, 1
        %s257 = scalar_lea.sflag [#allocation4], %s256
        %s258 = sand.u32 %s120, 1
        %s259 = smul.addr %s258, 56
        %s260 = scalar_lea.vmem [#allocation8], %s259
        %s261 = sadd.s32 %s27, %s28
        %s262 = smul.u32 8, %s261
        %s263 = sadd.s32 %s27, %s28
        %s264 = smul.u32 8, %s263
        %p265 = scmp.eq.s32.totalorder %s28, 0
        // Predicated region
        $region45: #{tpu_custom_call.1} parent=31 // pred_check
          %p266 = pneg %p265
        $region46: #{tpu_custom_call.1} parent=31 // pred_check_branch
          %268 = sbr.rel (%p266) target = $region48
        $region47: #{tpu_custom_call.1} parent=31 // pred_region
          %269 = vst [vmem:[%s260] sm:$0xff] 0.0
          %270 = vst [vmem:[%s260 + $0x8] sm:$0xff] 0.0
          %271 = vst [vmem:[%s260 + $0x10] sm:$0xff] 0.0
          %272 = vst [vmem:[%s260 + $0x18] sm:$0xff] 0.0
          %273 = vst [vmem:[%s260 + $0x20] sm:$0xff] 0.0
          %274 = vst [vmem:[%s260 + $0x28] sm:$0xff] 0.0
          %275 = vst [vmem:[%s260 + $0x30] sm:$0xff] 0.0
        $region48: #{tpu_custom_call.1} parent=31 // pred_fallthru
          _
        %s276 = smul.u32 0, 7
        %s277 = smul.addr %s276, 8
        %s278 = scalar_lea.vmem %s220, %s277 [#allocation2]
        %v279 = vld [vmem:[%s278] sm:$0xff]
        %v280 = vld [vmem:[%s278 + $0x8] sm:$0xff]
        %v281 = vld [vmem:[%s278 + $0x10] sm:$0xff]
        %v282 = vld [vmem:[%s278 + $0x18] sm:$0xff]
        %v283 = vld [vmem:[%s278 + $0x20] sm:$0xff]
        %v284 = vld [vmem:[%s278 + $0x28] sm:$0xff]
        %v285 = vld [vmem:[%s278 + $0x30] sm:$0xff]
        %s286 = smul.addr %s276, 8
        %s287 = scalar_lea.vmem %s229, %s286 [#allocation5]
        %v288 = vld [vmem:[%s287] sm:$0xff]
        %v289 = vld [vmem:[%s287 + $0x8] sm:$0xff]
        %v290 = vld [vmem:[%s287 + $0x10] sm:$0xff]
        %v291 = vld [vmem:[%s287 + $0x18] sm:$0xff]
        %v292 = vld [vmem:[%s287 + $0x20] sm:$0xff]
        %v293 = vld [vmem:[%s287 + $0x28] sm:$0xff]
        %v294 = vld [vmem:[%s287 + $0x30] sm:$0xff]
        %v295 = vsub.f32 %v279, %v288
        %v296 = vsub.f32 %v280, %v289
        %v297 = vsub.f32 %v281, %v290
        %v298 = vsub.f32 %v282, %v291
        %v299 = vsub.f32 %v283, %v292
        %v300 = vsub.f32 %v284, %v293
        %v301 = vsub.f32 %v285, %v294
        %v302 = vmul.f32 %v295, %v295
        %v303 = vmul.f32 %v296, %v296
        %v304 = vmul.f32 %v297, %v297
        %v305 = vmul.f32 %v298, %v298
        %v306 = vmul.f32 %v299, %v299
        %v307 = vmul.f32 %v300, %v300
        %v308 = vmul.f32 %v301, %v301
        %v309 = vadd.f32 %v302, 0.0
        %v310 = vadd.f32 %v303, 0.0
        %v311 = vadd.f32 %v304, 0.0
        %v312 = vadd.f32 %v305, 0.0
        %v313 = vadd.f32 %v306, 0.0
        %v314 = vadd.f32 %v307, 0.0
        %v315 = vadd.f32 %v308, 0.0
        %s316 = smul.u32 1, 7
        %s317 = smul.addr %s316, 8
        %s318 = scalar_lea.vmem %s220, %s317 [#allocation2]
        %v319 = vld [vmem:[%s318] sm:$0xff]
        %v320 = vld [vmem:[%s318 + $0x8] sm:$0xff]
        %v321 = vld [vmem:[%s318 + $0x10] sm:$0xff]
        %v322 = vld [vmem:[%s318 + $0x18] sm:$0xff]
        %v323 = vld [vmem:[%s318 + $0x20] sm:$0xff]
        %v324 = vld [vmem:[%s318 + $0x28] sm:$0xff]
        %v325 = vld [vmem:[%s318 + $0x30] sm:$0xff]
        %s326 = smul.addr %s316, 8
        %s327 = scalar_lea.vmem %s229, %s326 [#allocation5]
        %v328 = vld [vmem:[%s327] sm:$0xff]
        %v329 = vld [vmem:[%s327 + $0x8] sm:$0xff]
        %v330 = vld [vmem:[%s327 + $0x10] sm:$0xff]
        %v331 = vld [vmem:[%s327 + $0x18] sm:$0xff]
        %v332 = vld [vmem:[%s327 + $0x20] sm:$0xff]
        %v333 = vld [vmem:[%s327 + $0x28] sm:$0xff]
        %v334 = vld [vmem:[%s327 + $0x30] sm:$0xff]
        %v335 = vsub.f32 %v319, %v328
        %v336 = vsub.f32 %v320, %v329
        %v337 = vsub.f32 %v321, %v330
        %v338 = vsub.f32 %v322, %v331
        %v339 = vsub.f32 %v323, %v332
        %v340 = vsub.f32 %v324, %v333
        %v341 = vsub.f32 %v325, %v334
        %v342 = vmul.f32 %v335, %v335
        %v343 = vmul.f32 %v336, %v336
        %v344 = vmul.f32 %v337, %v337
        %v345 = vmul.f32 %v338, %v338
        %v346 = vmul.f32 %v339, %v339
        %v347 = vmul.f32 %v340, %v340
        %v348 = vmul.f32 %v341, %v341
        %v349 = vadd.f32 %v309, %v342
        %v350 = vadd.f32 %v310, %v343
        %v351 = vadd.f32 %v311, %v344
        %v352 = vadd.f32 %v312, %v345
        %v353 = vadd.f32 %v313, %v346
        %v354 = vadd.f32 %v314, %v347
        %v355 = vadd.f32 %v315, %v348
        %s356 = smul.u32 2, 7
        %s357 = smul.addr %s356, 8
        %s358 = scalar_lea.vmem %s220, %s357 [#allocation2]
        %v359 = vld [vmem:[%s358] sm:$0xff]
        %v360 = vld [vmem:[%s358 + $0x8] sm:$0xff]
        %v361 = vld [vmem:[%s358 + $0x10] sm:$0xff]
        %v362 = vld [vmem:[%s358 + $0x18] sm:$0xff]
        %v363 = vld [vmem:[%s358 + $0x20] sm:$0xff]
        %v364 = vld [vmem:[%s358 + $0x28] sm:$0xff]
        %v365 = vld [vmem:[%s358 + $0x30] sm:$0xff]
        %s366 = smul.addr %s356, 8
        %s367 = scalar_lea.vmem %s229, %s366 [#allocation5]
        %v368 = vld [vmem:[%s367] sm:$0xff]
        %v369 = vld [vmem:[%s367 + $0x8] sm:$0xff]
        %v370 = vld [vmem:[%s367 + $0x10] sm:$0xff]
        %v371 = vld [vmem:[%s367 + $0x18] sm:$0xff]
        %v372 = vld [vmem:[%s367 + $0x20] sm:$0xff]
        %v373 = vld [vmem:[%s367 + $0x28] sm:$0xff]
        %v374 = vld [vmem:[%s367 + $0x30] sm:$0xff]
        %v375 = vsub.f32 %v359, %v368
        %v376 = vsub.f32 %v360, %v369
        %v377 = vsub.f32 %v361, %v370
        %v378 = vsub.f32 %v362, %v371
        %v379 = vsub.f32 %v363, %v372
        %v380 = vsub.f32 %v364, %v373
        %v381 = vsub.f32 %v365, %v374
        %v382 = vmul.f32 %v375, %v375
        %v383 = vmul.f32 %v376, %v376
        %v384 = vmul.f32 %v377, %v377
        %v385 = vmul.f32 %v378, %v378
        %v386 = vmul.f32 %v379, %v379
        %v387 = vmul.f32 %v380, %v380
        %v388 = vmul.f32 %v381, %v381
        %v389 = vadd.f32 %v349, %v382
        %v390 = vadd.f32 %v350, %v383
        %v391 = vadd.f32 %v351, %v384
        %v392 = vadd.f32 %v352, %v385
        %v393 = vadd.f32 %v353, %v386
        %v394 = vadd.f32 %v354, %v387
        %v395 = vadd.f32 %v355, %v388
        %s396 = smul.u32 3, 7
        %s397 = smul.addr %s396, 8
        %s398 = scalar_lea.vmem %s220, %s397 [#allocation2]
        %v399 = vld [vmem:[%s398] sm:$0xff]
        %v400 = vld [vmem:[%s398 + $0x8] sm:$0xff]
        %v401 = vld [vmem:[%s398 + $0x10] sm:$0xff]
        %v402 = vld [vmem:[%s398 + $0x18] sm:$0xff]
        %v403 = vld [vmem:[%s398 + $0x20] sm:$0xff]
        %v404 = vld [vmem:[%s398 + $0x28] sm:$0xff]
        %v405 = vld [vmem:[%s398 + $0x30] sm:$0xff]
        %s406 = smul.addr %s396, 8
        %s407 = scalar_lea.vmem %s229, %s406 [#allocation5]
        %v408 = vld [vmem:[%s407] sm:$0xff]
        %v409 = vld [vmem:[%s407 + $0x8] sm:$0xff]
        %v410 = vld [vmem:[%s407 + $0x10] sm:$0xff]
        %v411 = vld [vmem:[%s407 + $0x18] sm:$0xff]
        %v412 = vld [vmem:[%s407 + $0x20] sm:$0xff]
        %v413 = vld [vmem:[%s407 + $0x28] sm:$0xff]
        %v414 = vld [vmem:[%s407 + $0x30] sm:$0xff]
        %v415 = vsub.f32 %v399, %v408
        %v416 = vsub.f32 %v400, %v409
        %v417 = vsub.f32 %v401, %v410
        %v418 = vsub.f32 %v402, %v411
        %v419 = vsub.f32 %v403, %v412
        %v420 = vsub.f32 %v404, %v413
        %v421 = vsub.f32 %v405, %v414
        %v422 = vmul.f32 %v415, %v415
        %v423 = vmul.f32 %v416, %v416
        %v424 = vmul.f32 %v417, %v417
        %v425 = vmul.f32 %v418, %v418
        %v426 = vmul.f32 %v419, %v419
        %v427 = vmul.f32 %v420, %v420
        %v428 = vmul.f32 %v421, %v421
        %v429 = vadd.f32 %v389, %v422
        %v430 = vadd.f32 %v390, %v423
        %v431 = vadd.f32 %v391, %v424
        %v432 = vadd.f32 %v392, %v425
        %v433 = vadd.f32 %v393, %v426
        %v434 = vadd.f32 %v394, %v427
        %v435 = vadd.f32 %v395, %v428
        %s436 = smul.u32 4, 7
        %s437 = smul.addr %s436, 8
        %s438 = scalar_lea.vmem %s220, %s437 [#allocation2]
        %v439 = vld [vmem:[%s438] sm:$0xff]
        %v440 = vld [vmem:[%s438 + $0x8] sm:$0xff]
        %v441 = vld [vmem:[%s438 + $0x10] sm:$0xff]
        %v442 = vld [vmem:[%s438 + $0x18] sm:$0xff]
        %v443 = vld [vmem:[%s438 + $0x20] sm:$0xff]
        %v444 = vld [vmem:[%s438 + $0x28] sm:$0xff]
        %v445 = vld [vmem:[%s438 + $0x30] sm:$0xff]
        %s446 = smul.addr %s436, 8
        %s447 = scalar_lea.vmem %s229, %s446 [#allocation5]
        %v448 = vld [vmem:[%s447] sm:$0xff]
        %v449 = vld [vmem:[%s447 + $0x8] sm:$0xff]
        %v450 = vld [vmem:[%s447 + $0x10] sm:$0xff]
        %v451 = vld [vmem:[%s447 + $0x18] sm:$0xff]
        %v452 = vld [vmem:[%s447 + $0x20] sm:$0xff]
        %v453 = vld [vmem:[%s447 + $0x28] sm:$0xff]
        %v454 = vld [vmem:[%s447 + $0x30] sm:$0xff]
        %v455 = vsub.f32 %v439, %v448
        %v456 = vsub.f32 %v440, %v449
        %v457 = vsub.f32 %v441, %v450
        %v458 = vsub.f32 %v442, %v451
        %v459 = vsub.f32 %v443, %v452
        %v460 = vsub.f32 %v444, %v453
        %v461 = vsub.f32 %v445, %v454
        %v462 = vmul.f32 %v455, %v455
        %v463 = vmul.f32 %v456, %v456
        %v464 = vmul.f32 %v457, %v457
        %v465 = vmul.f32 %v458, %v458
        %v466 = vmul.f32 %v459, %v459
        %v467 = vmul.f32 %v460, %v460
        %v468 = vmul.f32 %v461, %v461
        %v469 = vadd.f32 %v429, %v462
        %v470 = vadd.f32 %v430, %v463
        %v471 = vadd.f32 %v431, %v464
        %v472 = vadd.f32 %v432, %v465
        %v473 = vadd.f32 %v433, %v466
        %v474 = vadd.f32 %v434, %v467
        %v475 = vadd.f32 %v435, %v468
        %s476 = smul.u32 5, 7
        %s477 = smul.addr %s476, 8
        %s478 = scalar_lea.vmem %s220, %s477 [#allocation2]
        %v479 = vld [vmem:[%s478] sm:$0xff]
        %v480 = vld [vmem:[%s478 + $0x8] sm:$0xff]
        %v481 = vld [vmem:[%s478 + $0x10] sm:$0xff]
        %v482 = vld [vmem:[%s478 + $0x18] sm:$0xff]
        %v483 = vld [vmem:[%s478 + $0x20] sm:$0xff]
        %v484 = vld [vmem:[%s478 + $0x28] sm:$0xff]
        %v485 = vld [vmem:[%s478 + $0x30] sm:$0xff]
        %s486 = smul.addr %s476, 8
        %s487 = scalar_lea.vmem %s229, %s486 [#allocation5]
        %v488 = vld [vmem:[%s487] sm:$0xff]
        %v489 = vld [vmem:[%s487 + $0x8] sm:$0xff]
        %v490 = vld [vmem:[%s487 + $0x10] sm:$0xff]
        %v491 = vld [vmem:[%s487 + $0x18] sm:$0xff]
        %v492 = vld [vmem:[%s487 + $0x20] sm:$0xff]
        %v493 = vld [vmem:[%s487 + $0x28] sm:$0xff]
        %v494 = vld [vmem:[%s487 + $0x30] sm:$0xff]
        %v495 = vsub.f32 %v479, %v488
        %v496 = vsub.f32 %v480, %v489
        %v497 = vsub.f32 %v481, %v490
        %v498 = vsub.f32 %v482, %v491
        %v499 = vsub.f32 %v483, %v492
        %v500 = vsub.f32 %v484, %v493
        %v501 = vsub.f32 %v485, %v494
        %v502 = vmul.f32 %v495, %v495
        %v503 = vmul.f32 %v496, %v496
        %v504 = vmul.f32 %v497, %v497
        %v505 = vmul.f32 %v498, %v498
        %v506 = vmul.f32 %v499, %v499
        %v507 = vmul.f32 %v500, %v500
        %v508 = vmul.f32 %v501, %v501
        %v509 = vadd.f32 %v469, %v502
        %v510 = vadd.f32 %v470, %v503
        %v511 = vadd.f32 %v471, %v504
        %v512 = vadd.f32 %v472, %v505
        %v513 = vadd.f32 %v473, %v506
        %v514 = vadd.f32 %v474, %v507
        %v515 = vadd.f32 %v475, %v508
        %s516 = smul.u32 6, 7
        %s517 = smul.addr %s516, 8
        %s518 = scalar_lea.vmem %s220, %s517 [#allocation2]
        %v519 = vld [vmem:[%s518] sm:$0xff]
        %v520 = vld [vmem:[%s518 + $0x8] sm:$0xff]
        %v521 = vld [vmem:[%s518 + $0x10] sm:$0xff]
        %v522 = vld [vmem:[%s518 + $0x18] sm:$0xff]
        %v523 = vld [vmem:[%s518 + $0x20] sm:$0xff]
        %v524 = vld [vmem:[%s518 + $0x28] sm:$0xff]
        %v525 = vld [vmem:[%s518 + $0x30] sm:$0xff]
        %s526 = smul.addr %s516, 8
        %s527 = scalar_lea.vmem %s229, %s526 [#allocation5]
        %v528 = vld [vmem:[%s527] sm:$0xff]
        %v529 = vld [vmem:[%s527 + $0x8] sm:$0xff]
        %v530 = vld [vmem:[%s527 + $0x10] sm:$0xff]
        %v531 = vld [vmem:[%s527 + $0x18] sm:$0xff]
        %v532 = vld [vmem:[%s527 + $0x20] sm:$0xff]
        %v533 = vld [vmem:[%s527 + $0x28] sm:$0xff]
        %v534 = vld [vmem:[%s527 + $0x30] sm:$0xff]
        %v535 = vsub.f32 %v519, %v528
        %v536 = vsub.f32 %v520, %v529
        %v537 = vsub.f32 %v521, %v530
        %v538 = vsub.f32 %v522, %v531
        %v539 = vsub.f32 %v523, %v532
        %v540 = vsub.f32 %v524, %v533
        %v541 = vsub.f32 %v525, %v534
        %v542 = vmul.f32 %v535, %v535
        %v543 = vmul.f32 %v536, %v536
        %v544 = vmul.f32 %v537, %v537
        %v545 = vmul.f32 %v538, %v538
        %v546 = vmul.f32 %v539, %v539
        %v547 = vmul.f32 %v540, %v540
        %v548 = vmul.f32 %v541, %v541
        %v549 = vadd.f32 %v509, %v542
        %v550 = vadd.f32 %v510, %v543
        %v551 = vadd.f32 %v511, %v544
        %v552 = vadd.f32 %v512, %v545
        %v553 = vadd.f32 %v513, %v546
        %v554 = vadd.f32 %v514, %v547
        %v555 = vadd.f32 %v515, %v548
        %s556 = smul.u32 7, 7
        %s557 = smul.addr %s556, 8
        %s558 = scalar_lea.vmem %s220, %s557 [#allocation2]
        %v559 = vld [vmem:[%s558] sm:$0xff]
        %v560 = vld [vmem:[%s558 + $0x8] sm:$0xff]
        %v561 = vld [vmem:[%s558 + $0x10] sm:$0xff]
        %v562 = vld [vmem:[%s558 + $0x18] sm:$0xff]
        %v563 = vld [vmem:[%s558 + $0x20] sm:$0xff]
        %v564 = vld [vmem:[%s558 + $0x28] sm:$0xff]
        %v565 = vld [vmem:[%s558 + $0x30] sm:$0xff]
        %s566 = smul.addr %s556, 8
        %s567 = scalar_lea.vmem %s229, %s566 [#allocation5]
        %v568 = vld [vmem:[%s567] sm:$0xff]
        %v569 = vld [vmem:[%s567 + $0x8] sm:$0xff]
        %v570 = vld [vmem:[%s567 + $0x10] sm:$0xff]
        %v571 = vld [vmem:[%s567 + $0x18] sm:$0xff]
        %v572 = vld [vmem:[%s567 + $0x20] sm:$0xff]
        %v573 = vld [vmem:[%s567 + $0x28] sm:$0xff]
        %v574 = vld [vmem:[%s567 + $0x30] sm:$0xff]
        %v575 = vsub.f32 %v559, %v568
        %v576 = vsub.f32 %v560, %v569
        %v577 = vsub.f32 %v561, %v570
        %v578 = vsub.f32 %v562, %v571
        %v579 = vsub.f32 %v563, %v572
        %v580 = vsub.f32 %v564, %v573
        %v581 = vsub.f32 %v565, %v574
        %v582 = vmul.f32 %v575, %v575
        %v583 = vmul.f32 %v576, %v576
        %v584 = vmul.f32 %v577, %v577
        %v585 = vmul.f32 %v578, %v578
        %v586 = vmul.f32 %v579, %v579
        %v587 = vmul.f32 %v580, %v580
        %v588 = vmul.f32 %v581, %v581
        %v589 = vadd.f32 %v549, %v582
        %v590 = vadd.f32 %v550, %v583
        %v591 = vadd.f32 %v551, %v584
        %v592 = vadd.f32 %v552, %v585
        %v593 = vadd.f32 %v553, %v586
        %v594 = vadd.f32 %v554, %v587
        %v595 = vadd.f32 %v555, %v588
        %v596 = vld [vmem:[%s260] sm:$0xff]
        %v597 = vld [vmem:[%s260 + $0x8] sm:$0xff]
        %v598 = vld [vmem:[%s260 + $0x10] sm:$0xff]
        %v599 = vld [vmem:[%s260 + $0x18] sm:$0xff]
        %v600 = vld [vmem:[%s260 + $0x20] sm:$0xff]
        %v601 = vld [vmem:[%s260 + $0x28] sm:$0xff]
        %v602 = vld [vmem:[%s260 + $0x30] sm:$0xff]
        %v603 = vld [vmem:[#allocation7] sm:$0xff]
        %v604 = vld [vmem:[#allocation7 + $0x8] sm:$0xff]
        %v605 = vld [vmem:[#allocation7 + $0x10] sm:$0xff]
        %v606 = vld [vmem:[#allocation7 + $0x18] sm:$0xff]
        %v607 = vld [vmem:[#allocation7 + $0x20] sm:$0xff]
        %v608 = vld [vmem:[#allocation7 + $0x28] sm:$0xff]
        %v609 = vld [vmem:[#allocation7 + $0x30] sm:$0xff]
        %v610 = vmul.f32 %v589, %v603
        %v611 = vmul.f32 %v590, %v604
        %v612 = vmul.f32 %v591, %v605
        %v613 = vmul.f32 %v592, %v606
        %v614 = vmul.f32 %v593, %v607
        %v615 = vmul.f32 %v594, %v608
        %v616 = vmul.f32 %v595, %v609
        %v617 = vadd.f32 %v596, %v610
        %v618 = vadd.f32 %v597, %v611
        %v619 = vadd.f32 %v598, %v612
        %v620 = vadd.f32 %v599, %v613
        %v621 = vadd.f32 %v600, %v614
        %v622 = vadd.f32 %v601, %v615
        %v623 = vadd.f32 %v602, %v616
        %624 = vst [vmem:[%s260] sm:$0xff] %v617
        %625 = vst [vmem:[%s260 + $0x8] sm:$0xff] %v618
        %626 = vst [vmem:[%s260 + $0x10] sm:$0xff] %v619
        %627 = vst [vmem:[%s260 + $0x18] sm:$0xff] %v620
        %628 = vst [vmem:[%s260 + $0x20] sm:$0xff] %v621
        %629 = vst [vmem:[%s260 + $0x28] sm:$0xff] %v622
        %630 = vst [vmem:[%s260 + $0x30] sm:$0xff] %v623
        %s631 = sand.u32 %s120, 1
        %s632 = scalar_lea.sflag [#allocation4], %s631
        %s633 = sand.u32 %s120, 1
        %s634 = smul.addr %s633, 56
        %s635 = scalar_lea.vmem [#allocation8], %s634
        // Predicated region
        $region49: #{tpu_custom_call.1} parent=31 // pred_check
          %p636 = pneg %p130
        $region50: #{tpu_custom_call.1} parent=31 // pred_check_branch
          %638 = sbr.rel (%p636) target = $region52
        $region51: #{tpu_custom_call.1} parent=31 // pred_region
          %s640 = ssub.s32 896, 896
          %641 = vsyncadd %s632, %s640
          %s642 = smul.addr %s27, 7
          %s643 = smul.addr %s642, 128
          %s644 = scalar_lea.hbm %s3, %s643
          %s646 = sshll.u32 %s635, 4
          %s647 = int_to_ptr.vmem [resolvable:$true] %s646
          %649 = dma.vmem_to_hbm [thread:$0]  %s647, 896, %s644, %s632
        $region52: #{tpu_custom_call.1} parent=31 // pred_fallthru
          _
      $region32: #{tpu_custom_call.1} parent=5 // pred_fallthru
        _
      %p650 = scmp.le.s32.totalorder 2, %s18
      // Predicated region
      $region53: #{tpu_custom_call.1} parent=5 // pred_check
        %p651 = pneg %p650
      $region54: #{tpu_custom_call.1} parent=5 // pred_check_branch
        %653 = sbr.rel (%p651) target = $region56
      $region55: #{tpu_custom_call.1} parent=5 // pred_region
        %s654 = ssub.s32 %s18, 2
        // Predicated region
        $region57: #{tpu_custom_call.1} parent=55 // pred_check
          %p655 = pneg %p136
        $region58: #{tpu_custom_call.1} parent=55 // pred_check_branch
          %657 = sbr.rel (%p655) target = $region60
        $region59: #{tpu_custom_call.1} parent=55 // pred_region
          %s658 = sand.u32 %s121, 1
          %s659 = scalar_lea.sflag [#allocation4], %s658
          %s660 = sand.u32 %s121, 1
          %s661 = smul.addr %s660, 56
          %s662 = scalar_lea.vmem [#allocation8], %s661
          %663 = dma.done %s659, 896
        $region60: #{tpu_custom_call.1} parent=55 // pred_fallthru
          _
      $region56: #{tpu_custom_call.1} parent=5 // pred_fallthru
        _
    $region6: #{tpu_custom_call.1} parent=1 // loop_footer
      %s22 = sadd.s32 1, %s18
    $region7: #{tpu_custom_call.1} parent=1 // loop_footer_branch
      %17 = sbr.rel target = $region3
    $region8: #{tpu_custom_call.1} parent=1 // loop_exit
      _
    %664 = vsyncpa [#allocation3], 1
    %s665 = scalar_lea.sflag [#allocation3], 1
    %666 = vsyncpa %s665, 1
    %667 = vsyncpa [#allocation6], 1
    %s668 = scalar_lea.sflag [#allocation6], 1
    %669 = vsyncpa %s668, 1
    %670 = vsyncpa [#allocation4], 1
    %s671 = scalar_lea.sflag [#allocation4], 1
    %672 = vsyncpa %s671, 1

</llo_original>
